<compile_context>
chip_gen: v6e
topology: v6e:2x2x1
jax: 0.10.0
libtpu: 0.0.40
codegen_flags: <defaults>
</compile_context>

<pallas_src>
import jax
import jax.numpy as jnp
from jax.experimental import pallas as pl
from jax.experimental.pallas import tpu as pltpu


def _round_up(x, m):
    return ((x + m - 1) // m) * m


def _cdiv(a, b):
    return -(-a // b)


def _vmem_capacity_bytes():
    """Per-core VMEM capacity; conservative 64 MiB fallback (v7x per-TC)."""
    try:
        cap = getattr(pltpu.get_tpu_info(), "vmem_capacity_bytes", None)
        if cap:
            return int(cap)
    except Exception:
        pass
    return 64 << 20


def _fcn_head_kernel(w_ref, b_ref, x_ref, o_ref):
    # w_ref: (C_out, C_in)   -- resident across the grid (constant index_map)
    # b_ref: (C_out, 1)      -- f32, broadcast along the lane (HW) axis
    # x_ref: (C_in, t)       -- one spatial tile of one batch element
    # o_ref: (C_out, t)
    # HIGHEST precision keeps exact f32 numerics; the extra MXU passes are free
    # here because the kernel is HBM-bound with large MXU slack.
    acc = jnp.dot(w_ref[...], x_ref[...],
                  preferred_element_type=jnp.float32,
                  precision=jax.lax.Precision.HIGHEST)
    o_ref[...] = (acc + b_ref[...]).astype(o_ref.dtype)


def _fcn_head_kernel_batched(w_ref, b_ref, x_ref, o_ref):
    # x_ref: (bn, C_in, t); o_ref: (bn, C_out, t).  bn is small and static, so
    # a plain unrolled loop of 2-D matmuls keeps the MXU path simple.
    for i in range(x_ref.shape[0]):
        acc = jnp.dot(w_ref[...], x_ref[i],
                      preferred_element_type=jnp.float32,
                      precision=jax.lax.Precision.HIGHEST)
        o_ref[i] = (acc + b_ref[...]).astype(o_ref.dtype)


def fcn_head_forward(x_nchw, weight, bias, *, tile_hw=4096):
    """FCNHead forward (eval mode): Dropout2d(identity) + 1x1 Conv2d.

    x_nchw: (N, C_in, H, W); weight: (C_out, C_in); bias: (C_out,).
    Returns (N, C_out, H, W) in x_nchw.dtype.

    tile_hw: requested spatial tile width (lanes).  The default 4096 suits
    v5e/v6e (128 MiB VMEM); it is automatically clamped so the double-buffered
    working set fits VMEM (v7x: 64 MiB per TensorCore) and split further when
    needed to give the v7x megacore at least 2 parallel grid steps.
    """
    N, C_in, H, W = x_nchw.shape
    C_out = weight.shape[0]
    out_dtype = x_nchw.dtype

    # Dropout2d in eval mode == identity.

    HW = H * W
    x = x_nchw.reshape(N, C_in, HW)          # zero-copy for contiguous NCHW
    w = weight                               # (C_out, C_in) -- matmul LHS
    b = bias.astype(jnp.float32).reshape(C_out, 1)

    x_item = jnp.dtype(x.dtype).itemsize
    w_item = jnp.dtype(w.dtype).itemsize
    o_item = jnp.dtype(out_dtype).itemsize

    vmem_cap = _vmem_capacity_bytes()
    vmem_budget = vmem_cap * 3 // 4          # headroom for compiler scratch

    def step_bytes(t, bn):
        # double-buffered input/output tiles + resident weight & bias
        return (2 * bn * t * (C_in * x_item + C_out * o_item)
                + 2 * (C_out * C_in * w_item + C_out * 4))

    HW_128 = _round_up(HW, 128)
    # 1) requested tile, lane-aligned, clipped to the (128-rounded) extent.
    t = max(128, min(_round_up(tile_hw, 128), HW_128))
    # 2) shrink until the double-buffered working set fits VMEM (v7x: 64 MiB/TC).
    while step_bytes(t, 1) > vmem_budget and t > 128:
        t = max(128, (t // 2 // 128) * 128)
    # 3) keep >=2 grid steps when possible so both v7x TensorCores get work.
    while N * _cdiv(HW, t) < 2 and t > 128:
        t = max(128, (t // 2 // 128) * 128)
    # 4) a single block may as well cover the full (possibly ragged) extent.
    if t >= HW:
        t = HW

    hw_tiles = _cdiv(HW, t)

    # Small-HW case: pack several batch elements per grid step to amortize the
    # ~0.35 us per-step overhead, while keeping >=2 grid steps.
    bn = 1
    if hw_tiles == 1 and N > 1 and t <= 512:
        bn = max(1, min(N // 2, 2048 // max(t, 1)))
        while bn > 1 and (N % bn != 0 or step_bytes(t, bn) > vmem_budget):
            bn -= 1

    vmem_limit = int(min(max(step_bytes(t, bn) + (8 << 20), 32 << 20), vmem_cap))

    if bn == 1:
        kernel = _fcn_head_kernel
        x_spec = pl.BlockSpec((None, C_in, t), lambda n, j: (n, 0, j))
        o_spec = pl.BlockSpec((None, C_out, t), lambda n, j: (n, 0, j))
        grid = (N, hw_tiles)
    else:
        kernel = _fcn_head_kernel_batched
        x_spec = pl.BlockSpec((bn, C_in, t), lambda n, j: (n, 0, j))
        o_spec = pl.BlockSpec((bn, C_out, t), lambda n, j: (n, 0, j))
        grid = (N // bn, hw_tiles)

    out_flat = pl.pallas_call(
        kernel,
        out_shape=jax.ShapeDtypeStruct((N, C_out, HW), out_dtype),
        grid_spec=pltpu.PrefetchScalarGridSpec(
            num_scalar_prefetch=0,
            grid=grid,
            in_specs=[
                # Weight & bias: constant block index -> resident, no re-DMA.
                pl.BlockSpec((C_out, C_in), lambda n, j: (0, 0)),
                pl.BlockSpec((C_out, 1), lambda n, j: (0, 0)),
                x_spec,
            ],
            out_specs=o_spec,
        ),
        compiler_params=pltpu.CompilerParams(
            dimension_semantics=("parallel", "parallel"),
            vmem_limit_bytes=vmem_limit,
        ),
    )(w, b, x)

    return out_flat.reshape(N, C_out, H, W)


def init_params(key, embed_dim, num_classes):
    """Deterministic init mimicking nn.Conv2d default (kaiming-uniform-ish)."""
    kw, kb = jax.random.split(key)
    bound = 1.0 / jnp.sqrt(embed_dim)  # fan_in, kernel_size=1
    weight = jax.random.uniform(kw, (num_classes, embed_dim), jnp.float32,
                                minval=-bound, maxval=bound)
    bias = jax.random.uniform(kb, (num_classes,), jnp.float32,
                              minval=-bound, maxval=bound)
    return weight, bias


def _reference(x, weight, bias):
    # Exact-f32 reference (1x1 conv; eval-mode dropout == identity).
    out = jnp.einsum("nchw,oc->nohw", x, weight,
                     precision=jax.lax.Precision.HIGHEST)
    return out + bias[None, :, None, None]


if __name__ == "__main__":
    key = jax.random.PRNGKey(0)
    k_x, k_p, k_x2, k_x3 = jax.random.split(key, 4)

    # Small shapes consistent with the module.
    batch, embed_dim, num_classes, spatial = 2, 32, 8, 16
    x = jax.random.normal(k_x, (batch, embed_dim, spatial, spatial), jnp.float32)
    weight, bias = init_params(k_p, embed_dim, num_classes)

    fwd = jax.jit(fcn_head_forward)

    out = jax.block_until_ready(fwd(x, weight, bias))
    ref = _reference(x, weight, bias)
    assert out.shape == (batch, num_classes, spatial, spatial)
    assert jnp.allclose(out, ref, atol=1e-5, rtol=1e-5)

    # Non-128-multiple spatial extent (HW=130): exercises the masked ragged
    # last tile (no jnp.pad / output slice wrapper passes).
    x2 = jax.random.normal(k_x2, (1, embed_dim, 10, 13), jnp.float32)
    out2 = jax.block_until_ready(fwd(x2, weight, bias))
    ref2 = _reference(x2, weight, bias)
    assert out2.shape == (1, num_classes, 10, 13)
    assert jnp.allclose(out2, ref2, atol=1e-5, rtol=1e-5)

    # Larger batch at small HW: exercises the multi-image-per-step path.
    x3 = jax.random.normal(k_x3, (4, embed_dim, spatial, spatial), jnp.float32)
    out3 = jax.block_until_ready(fwd(x3, weight, bias))
    ref3 = _reference(x3, weight, bias)
    assert out3.shape == (4, num_classes, spatial, spatial)
    assert jnp.allclose(out3, ref3, atol=1e-5, rtol=1e-5)

    print("KERNEL_OK")
</pallas_src>

<mosaic_0001>
module attributes {stable_mosaic.version = 11 : i64} {
  func.func @_fcn_head_kernel(%arg0: i32, %arg1: i32, %arg2: memref<8x32xf32, #tpu.memory_space<vmem>>, %arg3: memref<8x1xf32, #tpu.memory_space<vmem>>, %arg4: memref<1x32x256xf32, #tpu.memory_space<vmem>>, %arg5: memref<1x8x256xf32, #tpu.memory_space<vmem>>) attributes {dimension_semantics = [#tpu.dimension_semantics<parallel>, #tpu.dimension_semantics<parallel>], iteration_bounds = array<i64: 2, 1>, scalar_prefetch = 0 : i64, scratch_operands = 0 : i64, tpu.core_type = #tpu.core_type<tc>, window_params = [{pipeline_mode = #tpu.pipeline_mode<synchronous>, transform_indices = @transform_0, window_bounds = array<i64: 8, 32>}, {pipeline_mode = #tpu.pipeline_mode<synchronous>, transform_indices = @transform_1, window_bounds = array<i64: 8, 1>}, {transform_indices = @transform_2, window_bounds = array<i64: 1, 32, 256>}, {transform_indices = @transform_3, window_bounds = array<i64: 1, 8, 256>}]} {
    %c0 = arith.constant 0 : index
    %c0_0 = arith.constant 0 : index
    %0 = vector.load %arg2[%c0, %c0_0] : memref<8x32xf32, #tpu.memory_space<vmem>>, vector<8x32xf32>
    %c0_1 = arith.constant 0 : index
    %c0_2 = arith.constant 0 : index
    %c0_3 = arith.constant 0 : index
    %1 = vector.load %arg4[%c0_1, %c0_2, %c0_3] : memref<1x32x256xf32, #tpu.memory_space<vmem>>, vector<1x32x256xf32>
    %2 = vector.shape_cast %1 : vector<1x32x256xf32> to vector<32x256xf32>
    %cst = arith.constant dense<0.000000e+00> : vector<8x256xf32>
    %3 = tpu.matmul %0, %2, %cst {dimension_numbers = #tpu.dot_dimension_numbers<[1], [0], [0], [1], [0, 0, 1, 1], [], []>, precision = #tpu.contract_precision<fp32>} : vector<8x32xf32>, vector<32x256xf32>, vector<8x256xf32> -> vector<8x256xf32>
    %c0_4 = arith.constant 0 : index
    %c0_5 = arith.constant 0 : index
    %4 = vector.load %arg3[%c0_4, %c0_5] : memref<8x1xf32, #tpu.memory_space<vmem>>, vector<8x1xf32>
    %5 = vector.broadcast %4 : vector<8x1xf32> to vector<8x256xf32>
    %6 = arith.addf %3, %5 : vector<8x256xf32>
    %c0_6 = arith.constant 0 : index
    %c0_7 = arith.constant 0 : index
    %c0_8 = arith.constant 0 : index
    %7 = vector.load %arg5[%c0_6, %c0_7, %c0_8] : memref<1x8x256xf32, #tpu.memory_space<vmem>>, vector<1x8x256xf32>
    %8 = vector.shape_cast %7 : vector<1x8x256xf32> to vector<8x256xf32>
    %9 = vector.shape_cast %6 : vector<8x256xf32> to vector<1x8x256xf32>
    tpu.vector_store %arg5[%c0_6, %c0_7, %c0_8], %9 {strides = array<i32>} : memref<1x8x256xf32, #tpu.memory_space<vmem>>, vector<1x8x256xf32>,
    return
  }
  func.func @transform_0(%arg0: i32, %arg1: i32) -> (i32, i32) {
    %c0_i32 = arith.constant 0 : i32
    %c0_i32_0 = arith.constant 0 : i32
    %c0_i32_1 = arith.constant 0 : i32
    return %c0_i32, %c0_i32_0 : i32, i32
  }
  func.func @transform_1(%arg0: i32, %arg1: i32) -> (i32, i32) {
    %c0_i32 = arith.constant 0 : i32
    %c0_i32_0 = arith.constant 0 : i32
    %c0_i32_1 = arith.constant 0 : i32
    return %c0_i32, %c0_i32_0 : i32, i32
  }
  func.func @transform_2(%arg0: i32, %arg1: i32) -> (i32, i32, i32) {
    %c0_i32 = arith.constant 0 : i32
    %c0_i32_0 = arith.constant 0 : i32
    return %arg0, %c0_i32, %arg1 : i32, i32, i32
  }
  func.func @transform_3(%arg0: i32, %arg1: i32) -> (i32, i32, i32) {
    %c0_i32 = arith.constant 0 : i32
    %c0_i32_0 = arith.constant 0 : i32
    return %arg0, %c0_i32, %arg1 : i32, i32, i32
  }
}

</mosaic_0001>

<llo_original>
// kernel: fcn_head_forward.1
$region0: #{fcn_head_forward.1}
  #allocation0 [shape = 'u32[]', space=smem, size = 0x4, offset = 0x4, fixed_abs, tag = 'smem constant byte address 0x4 - core index']
  #allocation1 [shape = 'u32[144,128]{1,0:T(1,128)}', space=vmem, size = 0x12000, scoped, tag = 'internal scratch']
  %s0 = inlined_call_operand.vmem [shape: f32[8,32], index: 0, kind: input, shape index: {}]
  %s1 = inlined_call_operand.vmem [shape: f32[8,1], index: 1, kind: input, shape index: {}]
  %s2 = inlined_call_operand.vmem [shape: f32[2,32,256], index: 2, kind: input, shape index: {}]
  %s3 = inlined_call_operand.vmem [shape: f32[2,8,256], index: 3, kind: output, shape index: {}]
  %s4 = sld [smem:[#allocation0]]
  $region45: #{fcn_head_forward.1} parent=0
    _
  %s6 = ssub.s32 1, %s4
  %s7 = scalar_select 0, %s6, %s4
  loop: start=0, step=1, limit=4
  $region2: #{fcn_head_forward.1} parent=0 // loop_pre_header
    _
  $region3: #{fcn_head_forward.1} parent=0 // loop_header
    %s9 = sphi 0, %s13
    %p10 = scmp.ge.s32.totalorder %s9, 4
    %s16 = sphi 0, %s28
    %s17 = sphi 0, %s24
    %s18 = sphi 0, %s16
    %s19 = sphi 0, %s17
    %s20 = sphi 0, %s18
    %s21 = sphi 0, %s19
    %s29 = sphi 0, %s29
    %s31 = sphi 0, %s29
    %s32 = sphi 0, %s31
    %s46 = sphi 0, %s32
    %s50 = sphi 0, %s50
    %s52 = sphi 0, %s50
    %s53 = sphi 0, %s52
    %s67 = sphi 0, %s53
    %s75 = sphi 0, %s77
    %s78 = sphi 0, %s75
    %s79 = sphi 0, %s78
    %s95 = sphi 0, %s79
    %s103 = sphi 0, %s105
    %s106 = sphi 0, %s103
    %s107 = sphi 0, %s106
    %s123 = sphi 0, %s107
  $region4: #{fcn_head_forward.1} parent=0 // loop_header_branch
    %12 = sbr.rel (%p10) target = $region8
  $region5: #{fcn_head_forward.1} parent=0 // loop_body
    %s14 = ssub.s32 %s9, 1
    %s15 = ssub.s32 %s9, 2
    %s22 = sadd.s32 1, %s17
    %p23 = scmp.ge.s32.totalorder %s22, 1
    %s24 = scalar_select %p23, 0, %s22
    %s25 = sadd.s32 1, %s16
    %s26 = scalar_select %p23, %s25, %s16
    %p27 = scmp.ge.s32.totalorder %s26, 2
    %s28 = scalar_select %p27, 0, %s26
    %s30 = sadd.s32 %s29, 1
    %p33 = scmp.eq.s32.totalorder %s9, 1
    %p34 = scmp.ne.s32.totalorder %s29, %s31
    %p35 = scmp.eq.s32.totalorder %s9, 0
    %p36 = por %p34, %p35
    %p37 = scmp.ne.s32.totalorder %s29, %s31
    %p38 = scmp.eq.s32.totalorder %s14, 1
    %p39 = por %p37, %p38
    %p40 = scmp.ne.s32.totalorder %s31, %s32
    %p41 = scmp.eq.s32.totalorder %s14, 0
    %p42 = por %p40, %p41
    %p43 = scmp.ne.s32.totalorder %s31, %s32
    %p44 = scmp.eq.s32.totalorder %s15, 1
    %p45 = por %p43, %p44
    %p47 = scmp.ne.s32.totalorder %s32, %s46
    %p48 = scmp.eq.s32.totalorder %s15, 0
    %p49 = por %p47, %p48
    %s51 = sadd.s32 %s50, 1
    %p54 = scmp.eq.s32.totalorder %s9, 1
    %p55 = scmp.ne.s32.totalorder %s50, %s52
    %p56 = scmp.eq.s32.totalorder %s9, 0
    %p57 = por %p55, %p56
    %p58 = scmp.ne.s32.totalorder %s50, %s52
    %p59 = scmp.eq.s32.totalorder %s14, 1
    %p60 = por %p58, %p59
    %p61 = scmp.ne.s32.totalorder %s52, %s53
    %p62 = scmp.eq.s32.totalorder %s14, 0
    %p63 = por %p61, %p62
    %p64 = scmp.ne.s32.totalorder %s52, %s53
    %p65 = scmp.eq.s32.totalorder %s15, 1
    %p66 = por %p64, %p65
    %p68 = scmp.ne.s32.totalorder %s53, %s67
    %p69 = scmp.eq.s32.totalorder %s15, 0
    %p70 = por %p68, %p69
    %s71 = ssub.s32 %s16, %s28
    %s72 = ssub.s32 %s17, %s24
    %s73 = sor.u32 %s71, %s72
    %p74 = scmp.eq.s32.totalorder %s73, 0
    %s76 = sadd.s32 %s75, 1
    %s77 = scalar_select %p74, %s75, %s76
    %p80 = pneg %p74
    %p81 = scmp.eq.s32.totalorder %s9, 1
    %p82 = por %p80, %p81
    %p83 = scmp.ne.s32.totalorder %s75, %s78
    %p84 = scmp.eq.s32.totalorder %s9, 0
    %p85 = por %p83, %p84
    %p86 = scmp.ne.s32.totalorder %s75, %s78
    %p87 = scmp.eq.s32.totalorder %s14, 1
    %p88 = por %p86, %p87
    %p89 = scmp.ne.s32.totalorder %s78, %s79
    %p90 = scmp.eq.s32.totalorder %s14, 0
    %p91 = por %p89, %p90
    %p92 = scmp.ne.s32.totalorder %s78, %s79
    %p93 = scmp.eq.s32.totalorder %s15, 1
    %p94 = por %p92, %p93
    %p96 = scmp.ne.s32.totalorder %s79, %s95
    %p97 = scmp.eq.s32.totalorder %s15, 0
    %p98 = por %p96, %p97
    %s99 = ssub.s32 %s16, %s28
    %s100 = ssub.s32 %s17, %s24
    %s101 = sor.u32 %s99, %s100
    %p102 = scmp.eq.s32.totalorder %s101, 0
    %s104 = sadd.s32 %s103, 1
    %s105 = scalar_select %p102, %s103, %s104
    %p108 = pneg %p102
    %p109 = scmp.eq.s32.totalorder %s9, 1
    %p110 = por %p108, %p109
    %p111 = scmp.ne.s32.totalorder %s103, %s106
    %p112 = scmp.eq.s32.totalorder %s9, 0
    %p113 = por %p111, %p112
    %p114 = scmp.ne.s32.totalorder %s103, %s106
    %p115 = scmp.eq.s32.totalorder %s14, 1
    %p116 = por %p114, %p115
    %p117 = scmp.ne.s32.totalorder %s106, %s107
    %p118 = scmp.eq.s32.totalorder %s14, 0
    %p119 = por %p117, %p118
    %p120 = scmp.ne.s32.totalorder %s106, %s107
    %p121 = scmp.eq.s32.totalorder %s15, 1
    %p122 = por %p120, %p121
    %p124 = scmp.ne.s32.totalorder %s107, %s123
    %p125 = scmp.eq.s32.totalorder %s15, 0
    %p126 = por %p124, %p125
    %p127 = scmp.le.s32.totalorder 1, %s9
    %p128 = scmp.lt.s32.totalorder %s9, 3
    %p129 = pnand %p127, %p128
    %p130 = pneg %p129
    // Predicated region
    $region9: #{fcn_head_forward.1} parent=5 // pred_check
      _
    $region10: #{fcn_head_forward.1} parent=5 // pred_check_branch
      %132 = sbr.rel (%p129) target = $region12
    $region11: #{fcn_head_forward.1} parent=5 // pred_region
      %s133 = ssub.s32 %s9, 1
      // Predicated region
      $region13: #{fcn_head_forward.1} parent=11 // pred_check
        %p134 = pneg %p42
      $region14: #{fcn_head_forward.1} parent=11 // pred_check_branch
        %136 = sbr.rel (%p134) target = $region16
      $region15: #{fcn_head_forward.1} parent=11 // pred_region
        _
      $region16: #{fcn_head_forward.1} parent=11 // pred_fallthru
        _
      // Predicated region
      $region17: #{fcn_head_forward.1} parent=11 // pred_check
        %p137 = pneg %p63
      $region18: #{fcn_head_forward.1} parent=11 // pred_check_branch
        %139 = sbr.rel (%p137) target = $region20
      $region19: #{fcn_head_forward.1} parent=11 // pred_region
        _
      $region20: #{fcn_head_forward.1} parent=11 // pred_fallthru
        _
    $region12: #{fcn_head_forward.1} parent=5 // pred_fallthru
      _
    %p140 = scmp.lt.s32.totalorder %s9, 2
    // Predicated region
    $region21: #{fcn_head_forward.1} parent=5 // pred_check
      %p141 = pneg %p140
    $region22: #{fcn_head_forward.1} parent=5 // pred_check_branch
      %143 = sbr.rel (%p141) target = $region24
    $region23: #{fcn_head_forward.1} parent=5 // pred_region
      // Predicated region
      $region25: #{fcn_head_forward.1} parent=23 // pred_check
        %p144 = pneg %p85
      $region26: #{fcn_head_forward.1} parent=23 // pred_check_branch
        %146 = sbr.rel (%p144) target = $region28
      $region27: #{fcn_head_forward.1} parent=23 // pred_region
        %s147 = smul.u32 2, %s17
        %p148 = scmp.lt.s32.totalorder %s16, 1
        %s149 = scalar_select %p148, %s16, 1
        %p150 = scmp.lt.s32.totalorder %s147, 1
        %s151 = scalar_select %p150, %s147, 1
        %s152 = smul.addr %s149, 8
        %s153 = sadd.s32 %s151, %s152
        %s154 = smul.addr %s153, 8
        %s155 = scalar_lea.vmem %s2, %s154
        %s156 = smul.u32 2, %s17
      $region28: #{fcn_head_forward.1} parent=23 // pred_fallthru
        _
    $region24: #{fcn_head_forward.1} parent=5 // pred_fallthru
      _
    %p157 = scmp.le.s32.totalorder 1, %s9
    %p158 = scmp.lt.s32.totalorder %s9, 3
    %p159 = pnand %p157, %p158
    %p160 = pneg %p159
    // Predicated region
    $region29: #{fcn_head_forward.1} parent=5 // pred_check
      _
    $region30: #{fcn_head_forward.1} parent=5 // pred_check_branch
      %162 = sbr.rel (%p159) target = $region32
    $region31: #{fcn_head_forward.1} parent=5 // pred_region
      %s163 = ssub.s32 %s9, 1
      %p164 = pneg %p42
      %p165 = pneg %p39
      %p166 = pneg %p63
      %p167 = pneg %p60
      %s168 = smul.u32 2, %s19
      %p169 = scmp.lt.s32.totalorder %s18, 1
      %s170 = scalar_select %p169, %s18, 1
      %p171 = scmp.lt.s32.totalorder %s168, 1
      %s172 = scalar_select %p171, %s168, 1
      %s173 = smul.addr %s170, 8
      %s174 = sadd.s32 %s172, %s173
      %s175 = smul.addr %s174, 8
      %s176 = scalar_lea.vmem %s2, %s175
      %p177 = pneg %p91
      %p178 = pneg %p88
      %p179 = pneg %p119
      %p180 = pneg %p116
      %s181 = smul.u32 2, %s19
      %p182 = scmp.lt.s32.totalorder %s18, 1
      %s183 = scalar_select %p182, %s18, 1
      %p184 = scmp.lt.s32.totalorder %s181, 1
      %s185 = scalar_select %p184, %s181, 1
      %s186 = smul.addr %s183, 2
      %s187 = sadd.s32 %s185, %s186
      %s188 = smul.addr %s187, 8
      %s189 = scalar_lea.vmem %s3, %s188
      %s190 = smul.u32 2, %s19
      %p191 = scmp.lt.s32.totalorder %s18, 1
      %s192 = scalar_select %p191, %s18, 1
      %p193 = scmp.lt.s32.totalorder %s190, 1
      %s194 = scalar_select %p193, %s190, 1
      %s195 = smul.addr %s192, 8
      %s196 = sadd.s32 %s194, %s195
      %s197 = smul.addr %s196, 8
      %s198 = scalar_lea.vmem %s2, %s197
      %s199 = smul.u32 2, %s19
      %s200 = smul.u32 2, %s19
      %p201 = scmp.lt.s32.totalorder %s18, 1
      %s202 = scalar_select %p201, %s18, 1
      %p203 = scmp.lt.s32.totalorder %s200, 1
      %s204 = scalar_select %p203, %s200, 1
      %s205 = smul.addr %s202, 2
      %s206 = sadd.s32 %s204, %s205
      %s207 = smul.addr %s206, 8
      %s208 = scalar_lea.vmem %s3, %s207
      %s209 = smul.u32 2, %s19
      %v210 = vld [vmem:[%s0] sm:$0xff]
      %v211 = vld [vmem:[%s198] sm:$0xff]
      %v212 = vld [vmem:[%s198 + $0x8] sm:$0xff]
      %v213 = vld [vmem:[%s198 + $0x10] sm:$0xff]
      %v214 = vld [vmem:[%s198 + $0x18] sm:$0xff]
      %v215 = vld [vmem:[%s198 + $0x20] sm:$0xff]
      %v216 = vld [vmem:[%s198 + $0x28] sm:$0xff]
      %v217 = vld [vmem:[%s198 + $0x30] sm:$0xff]
      %v218 = vld [vmem:[%s198 + $0x38] sm:$0xff]
      %v219 = vld [vmem:[%s1] sm:$0xff]
      %221 = vset.pattern.permute.xlu0 0
      %222 = vperm.xlu0 %221, %v219
      %v223 = vpop.permute.xlu0 %222
      %vm225 = vcmask 261120
      %v227 = vsel %vm225, %v210, 0
      %229 = vmatprep.subr.mxu0 0.0
      %230 = vmatpush1.msra.mxu0 0.0
      %231 = vmatprep.subr.mxu0 0.0
      %232 = vmatpush1.msra.mxu0 0.0
      %233 = vmatprep.subr.mxu0 0.0
      %234 = vmatpush1.msra.mxu0 0.0
      %235 = vmatprep.subr.mxu0 0.0
      %236 = vmatpush1.msra.mxu0 0.0
      %237 = vmatprep.subr.mxu0 0.0
      %238 = vmatpush1.msra.mxu0 0.0
      %239 = vmatprep.subr.mxu0 0.0
      %240 = vmatpush1.msra.mxu0 0.0
      %241 = vmatprep.subr.mxu0 0.0
      %242 = vmatpush1.msra.mxu0 0.0
      %243 = vmatprep.subr.mxu0 0.0
      %244 = vmatpush1.msra.mxu0 0.0
      %245 = vmatprep.subr.mxu0 0.0
      %246 = vmatpush1.msra.mxu0 0.0
      %247 = vmatprep.subr.mxu0 0.0
      %248 = vmatpush1.msra.mxu0 0.0
      %249 = vmatprep.subr.mxu0 0.0
      %250 = vmatpush1.msra.mxu0 0.0
      %251 = vmatprep.subr.mxu0 0.0
      %252 = vmatpush1.msra.mxu0 0.0
      %v253 = vand.u32 %v218, 4294901760
      %254 = vmatprep.subr.mxu0 %v253
      %v255 = vand.u32 %v217, 4294901760
      %256 = vmatpush1.msra.mxu0 %v255
      %v257 = vand.u32 %v216, 4294901760
      %258 = vmatprep.subr.mxu0 %v257
      %v259 = vand.u32 %v215, 4294901760
      %260 = vmatpush1.msra.mxu0 %v259
      %v261 = vand.u32 %v214, 4294901760
      %262 = vmatprep.subr.mxu0 %v261
      %v263 = vand.u32 %v213, 4294901760
      %264 = vmatpush1.msra.mxu0 %v263
      %v265 = vand.u32 %v212, 4294901760
      %266 = vmatprep.subr.mxu0 %v265
      %v267 = vand.u32 %v211, 4294901760
      %268 = vmatpush1.msra.mxu0 %v267
      %269 = vmatprep.subr.mxu0 0.0
      %270 = vmatpush2.msra.mxu0 0.0
      %271 = vmatprep.subr.mxu0 0.0
      %272 = vmatpush2.msra.mxu0 0.0
      %273 = vmatprep.subr.mxu0 0.0
      %274 = vmatpush2.msra.mxu0 0.0
      %275 = vmatprep.subr.mxu0 0.0
      %276 = vmatpush2.msra.mxu0 0.0
      %277 = vmatprep.subr.mxu0 0.0
      %278 = vmatpush2.msra.mxu0 0.0
      %279 = vmatprep.subr.mxu0 0.0
      %280 = vmatpush2.msra.mxu0 0.0
      %281 = vmatprep.subr.mxu0 0.0
      %282 = vmatpush2.msra.mxu0 0.0
      %283 = vmatprep.subr.mxu0 0.0
      %284 = vmatpush2.msra.mxu0 0.0
      %285 = vmatprep.subr.mxu0 0.0
      %286 = vmatpush2.msra.mxu0 0.0
      %287 = vmatprep.subr.mxu0 0.0
      %288 = vmatpush2.msra.mxu0 0.0
      %289 = vmatprep.subr.mxu0 0.0
      %290 = vmatpush2.msra.mxu0 0.0
      %291 = vmatprep.subr.mxu0 0.0
      %292 = vmatpush2.msra.mxu0 0.0
      %293 = vmatprep.subr.mxu0 0.0
      %294 = vmatpush2.msra.mxu0 0.0
      %295 = vmatprep.subr.mxu0 0.0
      %296 = vmatpush2.msra.mxu0 0.0
      %297 = vmatprep.subr.mxu0 0.0
      %298 = vmatpush2.msra.mxu0 0.0
      %299 = vmatprep.subr.mxu0 0.0
      %300 = vmatpush2.msra.mxu0 0.0
      %301 = vmatprep.mubr.f32.mxu0 0.0
      %v302 = vand.u32 %v227, 4294901760
      %v303 = vsub.f32 %v227, %v302
      %v304 = vand.u32 %v303, 4294901760
      %v305 = vsub.f32 %v303, %v304
      %v306 = vand.u32 %v305, 4294901760
      %307 = vmatmul.mubr.f32.gmra.mxu0 %v306
      %v308 = vpop.f32.mrf.mxu0
      %v309 = vadd.f32 %v223, %v308
      %v310 = vpop.f32.mrf.mxu0
      %v311 = vadd.f32 %v223, %v310
      %312 = vdwg.mxu0
      %313 = vmatprep.subr.mxu0 0.0
      %314 = vmatpush1.msra.mxu0 0.0
      %315 = vmatprep.subr.mxu0 0.0
      %316 = vmatpush1.msra.mxu0 0.0
      %317 = vmatprep.subr.mxu0 0.0
      %318 = vmatpush1.msra.mxu0 0.0
      %319 = vmatprep.subr.mxu0 0.0
      %320 = vmatpush1.msra.mxu0 0.0
      %321 = vmatprep.subr.mxu0 0.0
      %322 = vmatpush1.msra.mxu0 0.0
      %323 = vmatprep.subr.mxu0 0.0
      %324 = vmatpush1.msra.mxu0 0.0
      %325 = vmatprep.subr.mxu0 0.0
      %326 = vmatpush1.msra.mxu0 0.0
      %327 = vmatprep.subr.mxu0 0.0
      %328 = vmatpush1.msra.mxu0 0.0
      %329 = vmatprep.subr.mxu0 0.0
      %330 = vmatpush1.msra.mxu0 0.0
      %331 = vmatprep.subr.mxu0 0.0
      %332 = vmatpush1.msra.mxu0 0.0
      %333 = vmatprep.subr.mxu0 0.0
      %334 = vmatpush1.msra.mxu0 0.0
      %335 = vmatprep.subr.mxu0 0.0
      %336 = vmatpush1.msra.mxu0 0.0
      %v337 = vand.u32 %v218, 4294901760
      %v338 = vsub.f32 %v218, %v337
      %v339 = vand.u32 %v338, 4294901760
      %v340 = vsub.f32 %v338, %v339
      %v341 = vand.u32 %v340, 4294901760
      %342 = vmatprep.subr.mxu0 %v341
      %v343 = vand.u32 %v217, 4294901760
      %v344 = vsub.f32 %v217, %v343
      %v345 = vand.u32 %v344, 4294901760
      %v346 = vsub.f32 %v344, %v345
      %v347 = vand.u32 %v346, 4294901760
      %348 = vmatpush1.msra.mxu0 %v347
      %v349 = vand.u32 %v216, 4294901760
      %v350 = vsub.f32 %v216, %v349
      %v351 = vand.u32 %v350, 4294901760
      %v352 = vsub.f32 %v350, %v351
      %v353 = vand.u32 %v352, 4294901760
      %354 = vmatprep.subr.mxu0 %v353
      %v355 = vand.u32 %v215, 4294901760
      %v356 = vsub.f32 %v215, %v355
      %v357 = vand.u32 %v356, 4294901760
      %v358 = vsub.f32 %v356, %v357
      %v359 = vand.u32 %v358, 4294901760
      %360 = vmatpush1.msra.mxu0 %v359
      %v361 = vand.u32 %v214, 4294901760
      %v362 = vsub.f32 %v214, %v361
      %v363 = vand.u32 %v362, 4294901760
      %v364 = vsub.f32 %v362, %v363
      %v365 = vand.u32 %v364, 4294901760
      %366 = vmatprep.subr.mxu0 %v365
      %v367 = vand.u32 %v213, 4294901760
      %v368 = vsub.f32 %v213, %v367
      %v369 = vand.u32 %v368, 4294901760
      %v370 = vsub.f32 %v368, %v369
      %v371 = vand.u32 %v370, 4294901760
      %372 = vmatpush1.msra.mxu0 %v371
      %v373 = vand.u32 %v212, 4294901760
      %v374 = vsub.f32 %v212, %v373
      %v375 = vand.u32 %v374, 4294901760
      %v376 = vsub.f32 %v374, %v375
      %v377 = vand.u32 %v376, 4294901760
      %378 = vmatprep.subr.mxu0 %v377
      %v379 = vand.u32 %v211, 4294901760
      %v380 = vsub.f32 %v211, %v379
      %v381 = vand.u32 %v380, 4294901760
      %v382 = vsub.f32 %v380, %v381
      %v383 = vand.u32 %v382, 4294901760
      %384 = vmatpush1.msra.mxu0 %v383
      %385 = vmatprep.subr.mxu0 0.0
      %386 = vmatpush2.msra.mxu0 0.0
      %387 = vmatprep.subr.mxu0 0.0
      %388 = vmatpush2.msra.mxu0 0.0
      %389 = vmatprep.subr.mxu0 0.0
      %390 = vmatpush2.msra.mxu0 0.0
      %391 = vmatprep.subr.mxu0 0.0
      %392 = vmatpush2.msra.mxu0 0.0
      %393 = vmatprep.subr.mxu0 0.0
      %394 = vmatpush2.msra.mxu0 0.0
      %395 = vmatprep.subr.mxu0 0.0
      %396 = vmatpush2.msra.mxu0 0.0
      %397 = vmatprep.subr.mxu0 0.0
      %398 = vmatpush2.msra.mxu0 0.0
      %399 = vmatprep.subr.mxu0 0.0
      %400 = vmatpush2.msra.mxu0 0.0
      %401 = vmatprep.subr.mxu0 0.0
      %402 = vmatpush2.msra.mxu0 0.0
      %403 = vmatprep.subr.mxu0 0.0
      %404 = vmatpush2.msra.mxu0 0.0
      %405 = vmatprep.subr.mxu0 0.0
      %406 = vmatpush2.msra.mxu0 0.0
      %407 = vmatprep.subr.mxu0 0.0
      %408 = vmatpush2.msra.mxu0 0.0
      %409 = vmatprep.subr.mxu0 0.0
      %410 = vmatpush2.msra.mxu0 0.0
      %411 = vmatprep.subr.mxu0 0.0
      %412 = vmatpush2.msra.mxu0 0.0
      %413 = vmatprep.subr.mxu0 0.0
      %414 = vmatpush2.msra.mxu0 0.0
      %415 = vmatprep.subr.mxu0 0.0
      %416 = vmatpush2.msra.mxu0 0.0
      %417 = vmatprep.mubr.f32.mxu0 0.0
      %v418 = vand.u32 %v227, 4294901760
      %419 = vmatmul.mubr.f32.gmra.mxu0 %v418
      %v420 = vpop.f32.mrf.mxu0
      %v421 = vadd.f32 %v309, %v420
      %v422 = vpop.f32.mrf.mxu0
      %v423 = vadd.f32 %v311, %v422
      %424 = vdwg.mxu0
      %425 = vmatprep.subr.mxu0 0.0
      %426 = vmatpush1.msra.mxu0 0.0
      %427 = vmatprep.subr.mxu0 0.0
      %428 = vmatpush1.msra.mxu0 0.0
      %429 = vmatprep.subr.mxu0 0.0
      %430 = vmatpush1.msra.mxu0 0.0
      %431 = vmatprep.subr.mxu0 0.0
      %432 = vmatpush1.msra.mxu0 0.0
      %433 = vmatprep.subr.mxu0 0.0
      %434 = vmatpush1.msra.mxu0 0.0
      %435 = vmatprep.subr.mxu0 0.0
      %436 = vmatpush1.msra.mxu0 0.0
      %437 = vmatprep.subr.mxu0 0.0
      %438 = vmatpush1.msra.mxu0 0.0
      %439 = vmatprep.subr.mxu0 0.0
      %440 = vmatpush1.msra.mxu0 0.0
      %441 = vmatprep.subr.mxu0 0.0
      %442 = vmatpush1.msra.mxu0 0.0
      %443 = vmatprep.subr.mxu0 0.0
      %444 = vmatpush1.msra.mxu0 0.0
      %445 = vmatprep.subr.mxu0 0.0
      %446 = vmatpush1.msra.mxu0 0.0
      %447 = vmatprep.subr.mxu0 0.0
      %448 = vmatpush1.msra.mxu0 0.0
      %v449 = vand.u32 %v218, 4294901760
      %v450 = vsub.f32 %v218, %v449
      %451 = vmatprep.subr.mxu0 %v450
      %v452 = vand.u32 %v217, 4294901760
      %v453 = vsub.f32 %v217, %v452
      %454 = vmatpush1.msra.mxu0 %v453
      %v455 = vand.u32 %v216, 4294901760
      %v456 = vsub.f32 %v216, %v455
      %457 = vmatprep.subr.mxu0 %v456
      %v458 = vand.u32 %v215, 4294901760
      %v459 = vsub.f32 %v215, %v458
      %460 = vmatpush1.msra.mxu0 %v459
      %v461 = vand.u32 %v214, 4294901760
      %v462 = vsub.f32 %v214, %v461
      %463 = vmatprep.subr.mxu0 %v462
      %v464 = vand.u32 %v213, 4294901760
      %v465 = vsub.f32 %v213, %v464
      %466 = vmatpush1.msra.mxu0 %v465
      %v467 = vand.u32 %v212, 4294901760
      %v468 = vsub.f32 %v212, %v467
      %469 = vmatprep.subr.mxu0 %v468
      %v470 = vand.u32 %v211, 4294901760
      %v471 = vsub.f32 %v211, %v470
      %472 = vmatpush1.msra.mxu0 %v471
      %473 = vmatprep.subr.mxu0 0.0
      %474 = vmatpush2.msra.mxu0 0.0
      %475 = vmatprep.subr.mxu0 0.0
      %476 = vmatpush2.msra.mxu0 0.0
      %477 = vmatprep.subr.mxu0 0.0
      %478 = vmatpush2.msra.mxu0 0.0
      %479 = vmatprep.subr.mxu0 0.0
      %480 = vmatpush2.msra.mxu0 0.0
      %481 = vmatprep.subr.mxu0 0.0
      %482 = vmatpush2.msra.mxu0 0.0
      %483 = vmatprep.subr.mxu0 0.0
      %484 = vmatpush2.msra.mxu0 0.0
      %485 = vmatprep.subr.mxu0 0.0
      %486 = vmatpush2.msra.mxu0 0.0
      %487 = vmatprep.subr.mxu0 0.0
      %488 = vmatpush2.msra.mxu0 0.0
      %489 = vmatprep.subr.mxu0 0.0
      %490 = vmatpush2.msra.mxu0 0.0
      %491 = vmatprep.subr.mxu0 0.0
      %492 = vmatpush2.msra.mxu0 0.0
      %493 = vmatprep.subr.mxu0 0.0
      %494 = vmatpush2.msra.mxu0 0.0
      %495 = vmatprep.subr.mxu0 0.0
      %496 = vmatpush2.msra.mxu0 0.0
      %497 = vmatprep.subr.mxu0 0.0
      %498 = vmatpush2.msra.mxu0 0.0
      %499 = vmatprep.subr.mxu0 0.0
      %500 = vmatpush2.msra.mxu0 0.0
      %501 = vmatprep.subr.mxu0 0.0
      %502 = vmatpush2.msra.mxu0 0.0
      %503 = vmatprep.subr.mxu0 0.0
      %504 = vmatpush2.msra.mxu0 0.0
      %505 = vmatprep.mubr.f32.mxu0 0.0
      %v506 = vand.u32 %v227, 4294901760
      %v507 = vsub.f32 %v227, %v506
      %508 = vmatmul.mubr.f32.gmra.mxu0 %v507
      %v509 = vpop.f32.mrf.mxu0
      %v510 = vadd.f32 %v421, %v509
      %v511 = vpop.f32.mrf.mxu0
      %v512 = vadd.f32 %v423, %v511
      %513 = vdwg.mxu0
      %514 = vmatprep.subr.mxu0 0.0
      %515 = vmatpush1.msra.mxu0 0.0
      %516 = vmatprep.subr.mxu0 0.0
      %517 = vmatpush1.msra.mxu0 0.0
      %518 = vmatprep.subr.mxu0 0.0
      %519 = vmatpush1.msra.mxu0 0.0
      %520 = vmatprep.subr.mxu0 0.0
      %521 = vmatpush1.msra.mxu0 0.0
      %522 = vmatprep.subr.mxu0 0.0
      %523 = vmatpush1.msra.mxu0 0.0
      %524 = vmatprep.subr.mxu0 0.0
      %525 = vmatpush1.msra.mxu0 0.0
      %526 = vmatprep.subr.mxu0 0.0
      %527 = vmatpush1.msra.mxu0 0.0
      %528 = vmatprep.subr.mxu0 0.0
      %529 = vmatpush1.msra.mxu0 0.0
      %530 = vmatprep.subr.mxu0 0.0
      %531 = vmatpush1.msra.mxu0 0.0
      %532 = vmatprep.subr.mxu0 0.0
      %533 = vmatpush1.msra.mxu0 0.0
      %534 = vmatprep.subr.mxu0 0.0
      %535 = vmatpush1.msra.mxu0 0.0
      %536 = vmatprep.subr.mxu0 0.0
      %537 = vmatpush1.msra.mxu0 0.0
      %v538 = vand.u32 %v218, 4294901760
      %539 = vmatprep.subr.mxu0 %v538
      %v540 = vand.u32 %v217, 4294901760
      %541 = vmatpush1.msra.mxu0 %v540
      %v542 = vand.u32 %v216, 4294901760
      %543 = vmatprep.subr.mxu0 %v542
      %v544 = vand.u32 %v215, 4294901760
      %545 = vmatpush1.msra.mxu0 %v544
      %v546 = vand.u32 %v214, 4294901760
      %547 = vmatprep.subr.mxu0 %v546
      %v548 = vand.u32 %v213, 4294901760
      %549 = vmatpush1.msra.mxu0 %v548
      %v550 = vand.u32 %v212, 4294901760
      %551 = vmatprep.subr.mxu0 %v550
      %v552 = vand.u32 %v211, 4294901760
      %553 = vmatpush1.msra.mxu0 %v552
      %554 = vmatprep.subr.mxu0 0.0
      %555 = vmatpush2.msra.mxu0 0.0
      %556 = vmatprep.subr.mxu0 0.0
      %557 = vmatpush2.msra.mxu0 0.0
      %558 = vmatprep.subr.mxu0 0.0
      %559 = vmatpush2.msra.mxu0 0.0
      %560 = vmatprep.subr.mxu0 0.0
      %561 = vmatpush2.msra.mxu0 0.0
      %562 = vmatprep.subr.mxu0 0.0
      %563 = vmatpush2.msra.mxu0 0.0
      %564 = vmatprep.subr.mxu0 0.0
      %565 = vmatpush2.msra.mxu0 0.0
      %566 = vmatprep.subr.mxu0 0.0
      %567 = vmatpush2.msra.mxu0 0.0
      %568 = vmatprep.subr.mxu0 0.0
      %569 = vmatpush2.msra.mxu0 0.0
      %570 = vmatprep.subr.mxu0 0.0
      %571 = vmatpush2.msra.mxu0 0.0
      %572 = vmatprep.subr.mxu0 0.0
      %573 = vmatpush2.msra.mxu0 0.0
      %574 = vmatprep.subr.mxu0 0.0
      %575 = vmatpush2.msra.mxu0 0.0
      %576 = vmatprep.subr.mxu0 0.0
      %577 = vmatpush2.msra.mxu0 0.0
      %578 = vmatprep.subr.mxu0 0.0
      %579 = vmatpush2.msra.mxu0 0.0
      %580 = vmatprep.subr.mxu0 0.0
      %581 = vmatpush2.msra.mxu0 0.0
      %582 = vmatprep.subr.mxu0 0.0
      %583 = vmatpush2.msra.mxu0 0.0
      %584 = vmatprep.subr.mxu0 0.0
      %585 = vmatpush2.msra.mxu0 0.0
      %586 = vmatprep.mubr.f32.mxu0 0.0
      %v587 = vand.u32 %v227, 4294901760
      %v588 = vsub.f32 %v227, %v587
      %v589 = vand.u32 %v588, 4294901760
      %590 = vmatmul.mubr.f32.gmra.mxu0 %v589
      %v591 = vpop.f32.mrf.mxu0
      %v592 = vadd.f32 %v510, %v591
      %v593 = vpop.f32.mrf.mxu0
      %v594 = vadd.f32 %v512, %v593
      %595 = vdwg.mxu0
      %596 = vmatprep.subr.mxu0 0.0
      %597 = vmatpush1.msra.mxu0 0.0
      %598 = vmatprep.subr.mxu0 0.0
      %599 = vmatpush1.msra.mxu0 0.0
      %600 = vmatprep.subr.mxu0 0.0
      %601 = vmatpush1.msra.mxu0 0.0
      %602 = vmatprep.subr.mxu0 0.0
      %603 = vmatpush1.msra.mxu0 0.0
      %604 = vmatprep.subr.mxu0 0.0
      %605 = vmatpush1.msra.mxu0 0.0
      %606 = vmatprep.subr.mxu0 0.0
      %607 = vmatpush1.msra.mxu0 0.0
      %608 = vmatprep.subr.mxu0 0.0
      %609 = vmatpush1.msra.mxu0 0.0
      %610 = vmatprep.subr.mxu0 0.0
      %611 = vmatpush1.msra.mxu0 0.0
      %612 = vmatprep.subr.mxu0 0.0
      %613 = vmatpush1.msra.mxu0 0.0
      %614 = vmatprep.subr.mxu0 0.0
      %615 = vmatpush1.msra.mxu0 0.0
      %616 = vmatprep.subr.mxu0 0.0
      %617 = vmatpush1.msra.mxu0 0.0
      %618 = vmatprep.subr.mxu0 0.0
      %619 = vmatpush1.msra.mxu0 0.0
      %v620 = vand.u32 %v218, 4294901760
      %v621 = vsub.f32 %v218, %v620
      %v622 = vand.u32 %v621, 4294901760
      %623 = vmatprep.subr.mxu0 %v622
      %v624 = vand.u32 %v217, 4294901760
      %v625 = vsub.f32 %v217, %v624
      %v626 = vand.u32 %v625, 4294901760
      %627 = vmatpush1.msra.mxu0 %v626
      %v628 = vand.u32 %v216, 4294901760
      %v629 = vsub.f32 %v216, %v628
      %v630 = vand.u32 %v629, 4294901760
      %631 = vmatprep.subr.mxu0 %v630
      %v632 = vand.u32 %v215, 4294901760
      %v633 = vsub.f32 %v215, %v632
      %v634 = vand.u32 %v633, 4294901760
      %635 = vmatpush1.msra.mxu0 %v634
      %v636 = vand.u32 %v214, 4294901760
      %v637 = vsub.f32 %v214, %v636
      %v638 = vand.u32 %v637, 4294901760
      %639 = vmatprep.subr.mxu0 %v638
      %v640 = vand.u32 %v213, 4294901760
      %v641 = vsub.f32 %v213, %v640
      %v642 = vand.u32 %v641, 4294901760
      %643 = vmatpush1.msra.mxu0 %v642
      %v644 = vand.u32 %v212, 4294901760
      %v645 = vsub.f32 %v212, %v644
      %v646 = vand.u32 %v645, 4294901760
      %647 = vmatprep.subr.mxu0 %v646
      %v648 = vand.u32 %v211, 4294901760
      %v649 = vsub.f32 %v211, %v648
      %v650 = vand.u32 %v649, 4294901760
      %651 = vmatpush1.msra.mxu0 %v650
      %652 = vmatprep.subr.mxu0 0.0
      %653 = vmatpush2.msra.mxu0 0.0
      %654 = vmatprep.subr.mxu0 0.0
      %655 = vmatpush2.msra.mxu0 0.0
      %656 = vmatprep.subr.mxu0 0.0
      %657 = vmatpush2.msra.mxu0 0.0
      %658 = vmatprep.subr.mxu0 0.0
      %659 = vmatpush2.msra.mxu0 0.0
      %660 = vmatprep.subr.mxu0 0.0
      %661 = vmatpush2.msra.mxu0 0.0
      %662 = vmatprep.subr.mxu0 0.0
      %663 = vmatpush2.msra.mxu0 0.0
      %664 = vmatprep.subr.mxu0 0.0
      %665 = vmatpush2.msra.mxu0 0.0
      %666 = vmatprep.subr.mxu0 0.0
      %667 = vmatpush2.msra.mxu0 0.0
      %668 = vmatprep.subr.mxu0 0.0
      %669 = vmatpush2.msra.mxu0 0.0
      %670 = vmatprep.subr.mxu0 0.0
      %671 = vmatpush2.msra.mxu0 0.0
      %672 = vmatprep.subr.mxu0 0.0
      %673 = vmatpush2.msra.mxu0 0.0
      %674 = vmatprep.subr.mxu0 0.0
      %675 = vmatpush2.msra.mxu0 0.0
      %676 = vmatprep.subr.mxu0 0.0
      %677 = vmatpush2.msra.mxu0 0.0
      %678 = vmatprep.subr.mxu0 0.0
      %679 = vmatpush2.msra.mxu0 0.0
      %680 = vmatprep.subr.mxu0 0.0
      %681 = vmatpush2.msra.mxu0 0.0
      %682 = vmatprep.subr.mxu0 0.0
      %683 = vmatpush2.msra.mxu0 0.0
      %684 = vmatprep.mubr.f32.mxu0 0.0
      %v685 = vand.u32 %v227, 4294901760
      %686 = vmatmul.mubr.f32.gmra.mxu0 %v685
      %v687 = vpop.f32.mrf.mxu0
      %v688 = vadd.f32 %v592, %v687
      %v689 = vpop.f32.mrf.mxu0
      %v690 = vadd.f32 %v594, %v689
      %691 = vdwg.mxu0
      %692 = vmatprep.subr.mxu0 0.0
      %693 = vmatpush1.msra.mxu0 0.0
      %694 = vmatprep.subr.mxu0 0.0
      %695 = vmatpush1.msra.mxu0 0.0
      %696 = vmatprep.subr.mxu0 0.0
      %697 = vmatpush1.msra.mxu0 0.0
      %698 = vmatprep.subr.mxu0 0.0
      %699 = vmatpush1.msra.mxu0 0.0
      %700 = vmatprep.subr.mxu0 0.0
      %701 = vmatpush1.msra.mxu0 0.0
      %702 = vmatprep.subr.mxu0 0.0
      %703 = vmatpush1.msra.mxu0 0.0
      %704 = vmatprep.subr.mxu0 0.0
      %705 = vmatpush1.msra.mxu0 0.0
      %706 = vmatprep.subr.mxu0 0.0
      %707 = vmatpush1.msra.mxu0 0.0
      %708 = vmatprep.subr.mxu0 0.0
      %709 = vmatpush1.msra.mxu0 0.0
      %710 = vmatprep.subr.mxu0 0.0
      %711 = vmatpush1.msra.mxu0 0.0
      %712 = vmatprep.subr.mxu0 0.0
      %713 = vmatpush1.msra.mxu0 0.0
      %714 = vmatprep.subr.mxu0 0.0
      %715 = vmatpush1.msra.mxu0 0.0
      %v716 = vand.u32 %v218, 4294901760
      %717 = vmatprep.subr.mxu0 %v716
      %v718 = vand.u32 %v217, 4294901760
      %719 = vmatpush1.msra.mxu0 %v718
      %v720 = vand.u32 %v216, 4294901760
      %721 = vmatprep.subr.mxu0 %v720
      %v722 = vand.u32 %v215, 4294901760
      %723 = vmatpush1.msra.mxu0 %v722
      %v724 = vand.u32 %v214, 4294901760
      %725 = vmatprep.subr.mxu0 %v724
      %v726 = vand.u32 %v213, 4294901760
      %727 = vmatpush1.msra.mxu0 %v726
      %v728 = vand.u32 %v212, 4294901760
      %729 = vmatprep.subr.mxu0 %v728
      %v730 = vand.u32 %v211, 4294901760
      %731 = vmatpush1.msra.mxu0 %v730
      %732 = vmatprep.subr.mxu0 0.0
      %733 = vmatpush2.msra.mxu0 0.0
      %734 = vmatprep.subr.mxu0 0.0
      %735 = vmatpush2.msra.mxu0 0.0
      %736 = vmatprep.subr.mxu0 0.0
      %737 = vmatpush2.msra.mxu0 0.0
      %738 = vmatprep.subr.mxu0 0.0
      %739 = vmatpush2.msra.mxu0 0.0
      %740 = vmatprep.subr.mxu0 0.0
      %741 = vmatpush2.msra.mxu0 0.0
      %742 = vmatprep.subr.mxu0 0.0
      %743 = vmatpush2.msra.mxu0 0.0
      %744 = vmatprep.subr.mxu0 0.0
      %745 = vmatpush2.msra.mxu0 0.0
      %746 = vmatprep.subr.mxu0 0.0
      %747 = vmatpush2.msra.mxu0 0.0
      %748 = vmatprep.subr.mxu0 0.0
      %749 = vmatpush2.msra.mxu0 0.0
      %750 = vmatprep.subr.mxu0 0.0
      %751 = vmatpush2.msra.mxu0 0.0
      %752 = vmatprep.subr.mxu0 0.0
      %753 = vmatpush2.msra.mxu0 0.0
      %754 = vmatprep.subr.mxu0 0.0
      %755 = vmatpush2.msra.mxu0 0.0
      %756 = vmatprep.subr.mxu0 0.0
      %757 = vmatpush2.msra.mxu0 0.0
      %758 = vmatprep.subr.mxu0 0.0
      %759 = vmatpush2.msra.mxu0 0.0
      %760 = vmatprep.subr.mxu0 0.0
      %761 = vmatpush2.msra.mxu0 0.0
      %762 = vmatprep.subr.mxu0 0.0
      %763 = vmatpush2.msra.mxu0 0.0
      %764 = vmatprep.mubr.f32.mxu0 0.0
      %v765 = vand.u32 %v227, 4294901760
      %766 = vmatmul.mubr.f32.gmra.mxu0 %v765
      %v767 = vpop.f32.mrf.mxu0
      %v768 = vadd.f32 %v688, %v767
      %v769 = vpop.f32.mrf.mxu0
      %v770 = vadd.f32 %v690, %v769
      %771 = vdwg.mxu0
      %772 = vst [vmem:[%s208] sm:$0xff] %v768
      %773 = vst [vmem:[%s208 + $0x8] sm:$0xff] %v770
      %s774 = smul.u32 2, %s19
      %p775 = scmp.lt.s32.totalorder %s18, 1
      %s776 = scalar_select %p775, %s18, 1
      %p777 = scmp.lt.s32.totalorder %s774, 1
      %s778 = scalar_select %p777, %s774, 1
      %s779 = smul.addr %s776, 2
      %s780 = sadd.s32 %s778, %s779
      %s781 = smul.addr %s780, 8
      %s782 = scalar_lea.vmem %s3, %s781
      // Predicated region
      $region33: #{fcn_head_forward.1} parent=31 // pred_check
        %p783 = pneg %p116
      $region34: #{fcn_head_forward.1} parent=31 // pred_check_branch
        %785 = sbr.rel (%p783) target = $region36
      $region35: #{fcn_head_forward.1} parent=31 // pred_region
        %s786 = smul.u32 2, %s19
      $region36: #{fcn_head_forward.1} parent=31 // pred_fallthru
        _
    $region32: #{fcn_head_forward.1} parent=5 // pred_fallthru
      _
    %p787 = scmp.le.s32.totalorder 2, %s9
    // Predicated region
    $region37: #{fcn_head_forward.1} parent=5 // pred_check
      %p788 = pneg %p787
    $region38: #{fcn_head_forward.1} parent=5 // pred_check_branch
      %790 = sbr.rel (%p788) target = $region40
    $region39: #{fcn_head_forward.1} parent=5 // pred_region
      %s791 = ssub.s32 %s9, 2
      // Predicated region
      $region41: #{fcn_head_forward.1} parent=39 // pred_check
        %p792 = pneg %p122
      $region42: #{fcn_head_forward.1} parent=39 // pred_check_branch
        %794 = sbr.rel (%p792) target = $region44
      $region43: #{fcn_head_forward.1} parent=39 // pred_region
        %s795 = smul.u32 2, %s21
        %p796 = scmp.lt.s32.totalorder %s20, 1
        %s797 = scalar_select %p796, %s20, 1
        %p798 = scmp.lt.s32.totalorder %s795, 1
        %s799 = scalar_select %p798, %s795, 1
        %s800 = smul.addr %s797, 2
        %s801 = sadd.s32 %s799, %s800
        %s802 = smul.addr %s801, 8
        %s803 = scalar_lea.vmem %s3, %s802
      $region44: #{fcn_head_forward.1} parent=39 // pred_fallthru
        _
    $region40: #{fcn_head_forward.1} parent=5 // pred_fallthru
      _
  $region6: #{fcn_head_forward.1} parent=0 // loop_footer
    %s13 = sadd.s32 1, %s9
  $region7: #{fcn_head_forward.1} parent=0 // loop_footer_branch
    %8 = sbr.rel target = $region3
  $region8: #{fcn_head_forward.1} parent=0 // loop_exit
    _

</llo_original>
